<compile_context>
chip_gen: v7x
topology: tpu7x:2x2x1
jax: 0.10.0
libtpu: 0.0.40
codegen_flags: <defaults>
</compile_context>

<pallas_src>
import functools

import jax
import jax.numpy as jnp
from jax.experimental import pallas as pl
from jax.experimental.pallas import tpu as pltpu

_MIB = 1024 * 1024


def _round_up(x, m):
    return ((x + m - 1) // m) * m


def _vmem_limit_bytes():
    """Per-generation scoped-VMEM limit (conservative on 64 MiB v7x parts)."""
    cap = None
    try:
        cap = getattr(pltpu.get_tpu_info(), "vmem_capacity_bytes", None)
    except Exception:
        cap = None
    if cap is None or cap <= 64 * _MIB:
        return 48 * _MIB          # v7x / unknown: stay well under 64 MiB physical
    return 80 * _MIB              # v5e / v6e: 128 MiB physical VMEM


def _select_tiles(B, N, D, seq_bytes, msk_bytes, budget_bytes):
    """Pick (b_tile, n_tile, d_tile) respecting (8,128) layout rules and VMEM."""

    def cost(b, n, d):
        # 2x double-buffered seq tile + 2x msk tile + one f32 compute temp of
        # the seq tile (covers casts / matmul staging) + acc/out blocks.
        return (2 * b * n * d * seq_bytes
                + 2 * b * n * msk_bytes
                + b * n * d * 4
                + 3 * b * d * 4)

    b_min = B if B < 8 else 8            # must be multiple of 8 or == B
    n_min = N if N < 128 else 128        # must be multiple of 128 or == N

    # 1) d_tile: prefer full-D rows (contiguous HBM reads per (b, n) slice).
    if cost(b_min, n_min, D) <= budget_bytes:
        d_tile = D
    else:
        d_tile = min(D, 128)
        for c in (1024, 512, 256, 128):
            if c < D and cost(b_min, n_min, c) <= budget_bytes:
                d_tile = c
                break

    # 2) b_tile: grow toward multi-MiB per-step DMAs.
    b_tile = b_min
    if B > 8:
        for c in (64, 32, 16, 8):
            bc = min(c, B)               # multiple of 8, or == B
            if cost(bc, n_min, d_tile) <= budget_bytes:
                b_tile = bc
                break

    # 3) n_tile: grow the reduction block.
    n_tile = n_min
    if N > 128:
        for c in (2048, 1024, 512, 256, 128):
            nc = min(c, N)               # multiple of 128, or == N
            if cost(b_tile, nc, d_tile) <= budget_bytes:
                n_tile = nc
                break

    # 4) Megacore: guarantee >= 2 parallel grid blocks (v7x has 2 TC/chip).
    grid_b = pl.cdiv(B, b_tile)
    grid_d = pl.cdiv(D, d_tile)
    if grid_b * grid_d < 2 and D >= 256:
        d_tile = _round_up(pl.cdiv(D, 2), 128)   # lane-aligned half-D blocks

    return b_tile, n_tile, d_tile


# --------------------------------------------------------------------------
# Kernels
# --------------------------------------------------------------------------
def _readout_mean_kernel(seq_ref, out_ref, *acc, inv_n, n_rem):
    # seq_ref: (b_tile, n_tile, d_tile)  out_ref: (b_tile, d_tile)
    # acc (optional scratch): (b_tile, d_tile) f32; f32 outputs accumulate
    # directly into out_ref (resident across the N grid axis).
    acc_ref = acc[0] if acc else out_ref
    k = pl.program_id(2)
    nk = pl.num_programs(2)

    @pl.when(k == 0)
    def _init():
        acc_ref[...] = jnp.zeros_like(acc_ref)

    def _accum(n_valid):
        acc_ref[...] += jnp.sum(seq_ref[:, :n_valid, :].astype(jnp.float32),
                                axis=1)

    if n_rem == 0:
        _accum(seq_ref.shape[1])
    else:
        # Last N block is partial: only reduce the valid rows (tail handling).
        @pl.when(k < nk - 1)
        def _full():
            _accum(seq_ref.shape[1])

        @pl.when(k == nk - 1)
        def _tail():
            _accum(n_rem)

    @pl.when(k == nk - 1)
    def _finalize():
        out_ref[...] = (acc_ref[...] * inv_n).astype(out_ref.dtype)


def _readout_masked_kernel(seq_ref, msk_ref, scale_ref, out_ref, *acc, n_rem):
    # seq_ref: (b_tile, n_tile, d_tile)   msk_ref: (b_tile, n_tile)
    # scale_ref: (1,1) f32 in SMEM = 1 / (N * sum(msk))   (global, torch-style)
    acc_ref = acc[0] if acc else out_ref
    k = pl.program_id(2)
    nk = pl.num_programs(2)

    @pl.when(k == 0)
    def _init():
        acc_ref[...] = jnp.zeros_like(acc_ref)

    def _accum(n_valid):
        seq = seq_ref[:, :n_valid, :]
        msk = msk_ref[:, :n_valid].astype(seq.dtype)
        # Contraction over N fuses mask-apply with the reduction and avoids a
        # (b_tile, n_tile, d_tile) broadcast temporary; f32 accumulation.
        part = jnp.einsum("bkn,bnd->bkd", msk[:, None, :], seq,
                          preferred_element_type=jnp.float32)
        acc_ref[...] += part[:, 0, :]

    if n_rem == 0:
        _accum(seq_ref.shape[1])
    else:
        @pl.when(k < nk - 1)
        def _full():
            _accum(seq_ref.shape[1])

        @pl.when(k == nk - 1)
        def _tail():
            _accum(n_rem)

    @pl.when(k == nk - 1)
    def _finalize():
        out_ref[...] = (acc_ref[...] * scale_ref[0, 0]).astype(out_ref.dtype)


# --------------------------------------------------------------------------
# Wrapper
# --------------------------------------------------------------------------
def readout(seq, msk=None):
    """Pallas implementation of Readout.forward.

    seq: (B, N, D);  msk: None or (B, N);  returns (B, D).
    """
    B, N, D = seq.shape

    vmem_limit = _vmem_limit_bytes()
    tile_budget = int(vmem_limit * 0.8)
    seq_bytes = seq.dtype.itemsize
    msk_bytes = msk.dtype.itemsize if msk is not None else 0

    b_tile, n_tile, d_tile = _select_tiles(B, N, D, seq_bytes, msk_bytes,
                                           tile_budget)
    grid = (pl.cdiv(B, b_tile), pl.cdiv(D, d_tile), pl.cdiv(N, n_tile))
    n_rem = N % n_tile                      # partial last N block (0 = none)

    out_dtype = seq.dtype
    use_scratch = out_dtype != jnp.float32  # f32 out accumulates in place
    scratch = [pltpu.VMEM((b_tile, d_tile), jnp.float32)] if use_scratch else []

    seq_spec = pl.BlockSpec((b_tile, n_tile, d_tile), lambda b, d, k: (b, k, d))
    out_spec = pl.BlockSpec((b_tile, d_tile), lambda b, d, k: (b, d))
    out_shape = jax.ShapeDtypeStruct((B, D), out_dtype)

    cparams = pltpu.CompilerParams(
        dimension_semantics=("parallel", "parallel", "arbitrary"),
        vmem_limit_bytes=vmem_limit,
    )

    if msk is None:
        grid_spec = pltpu.PrefetchScalarGridSpec(
            num_scalar_prefetch=0,
            grid=grid,
            in_specs=[seq_spec],
            out_specs=out_spec,
            scratch_shapes=scratch,
        )
        kernel = functools.partial(_readout_mean_kernel,
                                   inv_n=1.0 / float(N), n_rem=n_rem)
        return pl.pallas_call(kernel, out_shape=out_shape, grid_spec=grid_spec,
                              compiler_params=cparams)(seq)

    # torch.sum(msk) is a global (all-batches) scalar; fold it with 1/N into a
    # single scale so the finalize step is one multiply (no per-element divide).
    scale = (1.0 / (jnp.float32(N) * jnp.sum(msk.astype(jnp.float32)))
             ).reshape(1, 1)
    msk_spec = pl.BlockSpec((b_tile, n_tile), lambda b, d, k: (b, k))
    grid_spec = pltpu.PrefetchScalarGridSpec(
        num_scalar_prefetch=0,
        grid=grid,
        in_specs=[seq_spec, msk_spec,
                  pl.BlockSpec(memory_space=pltpu.MemorySpace.SMEM)],
        out_specs=out_spec,
        scratch_shapes=scratch,
    )
    kernel = functools.partial(_readout_masked_kernel, n_rem=n_rem)
    return pl.pallas_call(kernel, out_shape=out_shape, grid_spec=grid_spec,
                          compiler_params=cparams)(seq, msk, scale)


def _readout_reference(seq, msk=None):
    # Pure-JAX reference mirroring the PyTorch module exactly.
    if msk is None:
        return jnp.mean(seq, axis=1)
    return jnp.mean(seq * msk[..., None], axis=1) / jnp.sum(msk)


if __name__ == "__main__":
    key = jax.random.PRNGKey(0)
    k1, k2, k3, k4 = jax.random.split(key, 4)

    # --- small shapes matching the module's toy usage ----------------------
    B, N, D = 2, 8, 32
    seq = jax.random.normal(k1, (B, N, D), dtype=jnp.float32)
    msk = (jax.random.uniform(k2, (B, N)) > 0.5).astype(jnp.float32)

    out_masked = readout(seq, msk)
    jax.block_until_ready(out_masked)
    assert out_masked.shape == (B, D)
    assert jnp.allclose(out_masked, _readout_reference(seq, msk),
                        atol=1e-5, rtol=1e-5)

    out_mean = readout(seq, None)
    jax.block_until_ready(out_mean)
    assert out_mean.shape == (B, D)
    assert jnp.allclose(out_mean, _readout_reference(seq, None),
                        atol=1e-5, rtol=1e-5)

    # --- shapes exercising multi-step N grid, N tail handling, D split -----
    B2, N2, D2 = 4, 2100, 256
    seq2 = jax.random.normal(k3, (B2, N2, D2), dtype=jnp.float32)
    msk2 = (jax.random.uniform(k4, (B2, N2)) > 0.3).astype(jnp.float32)

    out2_masked = readout(seq2, msk2)
    jax.block_until_ready(out2_masked)
    assert jnp.allclose(out2_masked, _readout_reference(seq2, msk2),
                        atol=1e-5, rtol=1e-4)

    out2_mean = readout(seq2, None)
    jax.block_until_ready(out2_mean)
    assert jnp.allclose(out2_mean, _readout_reference(seq2, None),
                        atol=1e-5, rtol=1e-4)

    print("KERNEL_OK")
</pallas_src>

<mosaic_0001>
module attributes {stable_mosaic.version = 11 : i64} {
  func.func @_readout_masked_kernel(%arg0: i32, %arg1: i32, %arg2: i32, %arg3: memref<2x8x32xf32, #tpu.memory_space<vmem>>, %arg4: memref<2x8xf32, #tpu.memory_space<vmem>>, %arg5: memref<1x1xf32, #tpu.memory_space<smem>>, %arg6: memref<2x32xf32, #tpu.memory_space<vmem>>) attributes {dimension_semantics = [#tpu.dimension_semantics<parallel>, #tpu.dimension_semantics<parallel>, #tpu.dimension_semantics<arbitrary>], iteration_bounds = array<i64: 1, 1, 1>, scalar_prefetch = 0 : i64, scratch_operands = 0 : i64, tpu.core_type = #tpu.core_type<tc>, window_params = [{transform_indices = @transform_0, window_bounds = array<i64: 2, 8, 32>}, {transform_indices = @transform_1, window_bounds = array<i64: 2, 8>}, {transform_indices = @transform_2, window_bounds = array<i64: 1, 1>}, {transform_indices = @transform_3, window_bounds = array<i64: 2, 32>}]} {
    %c0_i32 = arith.constant 0 : i32
    %0 = arith.cmpi eq, %arg2, %c0_i32 : i32
    %1 = arith.extui %0 : i1 to i32
    %c0_i32_0 = arith.constant 0 : i32
    %2 = arith.cmpi ne, %1, %c0_i32_0 : i32
    scf.if %2 {
      %cst_11 = arith.constant 0.000000e+00 : f32
      %14 = vector.broadcast %cst_11 : f32 to vector<2x32xf32>
      %c0_12 = arith.constant 0 : index
      %c0_13 = arith.constant 0 : index
      %15 = vector.load %arg6[%c0_12, %c0_13] : memref<2x32xf32, #tpu.memory_space<vmem>>, vector<2x32xf32>
      tpu.vector_store %arg6[%c0_12, %c0_13], %14 {strides = array<i32>} : memref<2x32xf32, #tpu.memory_space<vmem>>, vector<2x32xf32>,
    } else {
    }
    %c0 = arith.constant 0 : index
    %c0_1 = arith.constant 0 : index
    %c0_2 = arith.constant 0 : index
    %3 = vector.load %arg3[%c0, %c0_1, %c0_2] : memref<2x8x32xf32, #tpu.memory_space<vmem>>, vector<2x8x32xf32>
    %c0_3 = arith.constant 0 : index
    %c0_4 = arith.constant 0 : index
    %4 = vector.load %arg4[%c0_3, %c0_4] : memref<2x8xf32, #tpu.memory_space<vmem>>, vector<2x8xf32>
    %5 = vector.shape_cast %4 : vector<2x8xf32> to vector<2x1x8xf32>
    "tpu.trace_start"() <{level = 10 : i32, message = "bkn,bnd->bkd"}> : () -> ()
    %cst = arith.constant dense<0.000000e+00> : vector<2x1x32xf32>
    %6 = tpu.matmul %5, %3, %cst {dimension_numbers = #tpu.dot_dimension_numbers<[2], [1], [1], [2], [0, 0, 0, 1, 1, 2], [0], [0]>} : vector<2x1x8xf32>, vector<2x8x32xf32>, vector<2x1x32xf32> -> vector<2x1x32xf32>
    "tpu.trace_stop"() : () -> ()
    %c0_5 = arith.constant 0 : index
    %c0_6 = arith.constant 0 : index
    %7 = vector.load %arg6[%c0_5, %c0_6] : memref<2x32xf32, #tpu.memory_space<vmem>>, vector<2x32xf32>
    %8 = vector.shape_cast %6 : vector<2x1x32xf32> to vector<2x32xf32>
    %9 = arith.addf %7, %8 : vector<2x32xf32>
    %c0_7 = arith.constant 0 : index
    %c0_8 = arith.constant 0 : index
    %10 = vector.load %arg6[%c0_7, %c0_8] : memref<2x32xf32, #tpu.memory_space<vmem>>, vector<2x32xf32>
    tpu.vector_store %arg6[%c0_7, %c0_8], %9 {strides = array<i32>} : memref<2x32xf32, #tpu.memory_space<vmem>>, vector<2x32xf32>,
    %c0_i32_9 = arith.constant 0 : i32
    %11 = arith.cmpi eq, %arg2, %c0_i32_9 : i32
    %12 = arith.extui %11 : i1 to i32
    %c0_i32_10 = arith.constant 0 : i32
    %13 = arith.cmpi ne, %12, %c0_i32_10 : i32
    scf.if %13 {
      %c0_11 = arith.constant 0 : index
      %c0_12 = arith.constant 0 : index
      %14 = vector.load %arg6[%c0_11, %c0_12] : memref<2x32xf32, #tpu.memory_space<vmem>>, vector<2x32xf32>
      %c0_13 = arith.constant 0 : index
      %c0_14 = arith.constant 0 : index
      %15 = memref.load %arg5[%c0_13, %c0_14] : memref<1x1xf32, #tpu.memory_space<smem>>
      %16 = vector.broadcast %15 : f32 to vector<2x32xf32>
      %17 = arith.mulf %14, %16 : vector<2x32xf32>
      %c0_15 = arith.constant 0 : index
      %c0_16 = arith.constant 0 : index
      %18 = vector.load %arg6[%c0_15, %c0_16] : memref<2x32xf32, #tpu.memory_space<vmem>>, vector<2x32xf32>
      tpu.vector_store %arg6[%c0_15, %c0_16], %17 {strides = array<i32>} : memref<2x32xf32, #tpu.memory_space<vmem>>, vector<2x32xf32>,
    } else {
    }
    return
  }
  func.func @transform_0(%arg0: i32, %arg1: i32, %arg2: i32) -> (i32, i32, i32) {
    %c0_i32 = arith.constant 0 : i32
    return %arg0, %arg2, %arg1 : i32, i32, i32
  }
  func.func @transform_1(%arg0: i32, %arg1: i32, %arg2: i32) -> (i32, i32) {
    %c0_i32 = arith.constant 0 : i32
    return %arg0, %arg2 : i32, i32
  }
  func.func @transform_2(%arg0: i32, %arg1: i32, %arg2: i32) -> (i32, i32) {
    %c0_i32 = arith.constant 0 : i32
    %c0_i32_0 = arith.constant 0 : i32
    %c0_i32_1 = arith.constant 0 : i32
    return %c0_i32, %c0_i32_0 : i32, i32
  }
  func.func @transform_3(%arg0: i32, %arg1: i32, %arg2: i32) -> (i32, i32) {
    %c0_i32 = arith.constant 0 : i32
    return %arg0, %arg1 : i32, i32
  }
}

</mosaic_0001>

<llo_original>
// kernel: tpu_custom_call.1
$region0: #{tpu_custom_call.1}
  #allocation0 [shape = 'u32[]', space=smem, size = 0x4, offset = 0x4, fixed_abs, tag = 'smem constant byte address 0x4 - core index']
  #allocation1 [shape = 'u32[144,128]{1,0:T(1,128)}', space=vmem, size = 0x12000, scoped, tag = 'internal scratch']
  #allocation2 [shape = 'f32[1,1]{1,0:T(1,128)S(6)}', space=smem, size = 0x200, scoped, tag = 'scoped memory for tpu_custom_call.1']
  %s0 = inlined_call_operand.hbm [shape: f32[2,8,32], index: 0, kind: input, shape index: {}]
  %s1 = inlined_call_operand.vmem [shape: f32[2,8], index: 1, kind: input, shape index: {}]
  %s2 = inlined_call_operand.<no memory space> [shape: f32[1,1], index: 2, kind: input, shape index: {}]
  %s3 = inlined_call_operand.hbm [shape: f32[2,32], index: 3, kind: output, shape index: {}]
  %s4 = sld [smem:[#allocation0]]
  $region34: #{tpu_custom_call.1} parent=0
    _
  %s6 = ssub.s32 1, %s4
  %s7 = scalar_select 0, %s6, %s4
  %8 = sst [smem:[#allocation2]] %s2
  $region1: #{tpu_custom_call.1} parent=0
    #allocation3 [shape = 'u8[8192]{0}', space=vmem, size = 0x2000, scoped, tag = 'input window, operand 0, single buffered']
    #allocation4 [shape = 's32[1]{0}', space=sflag, size = 0x4, scoped, tag = 'scoped memory for tpu_custom_call.1']
    #allocation5 [shape = 's32[1]{0}', space=sflag, size = 0x4, scoped, tag = 'scoped memory for tpu_custom_call.1']
    #allocation6 [shape = 'u8[1024]{0}', space=vmem, size = 0x400, scoped, tag = 'output window, operand 0, single buffered']
    %9 = vsyncpa [#allocation4], 0
    %10 = vsyncpa [#allocation5], 0
    // Predicated region
    $region2: #{tpu_custom_call.1} parent=1 // pred_check
      _
    $region3: #{tpu_custom_call.1} parent=1 // pred_check_branch
      %12 = sbr.rel (0) target = $region5
    $region4: #{tpu_custom_call.1} parent=1 // pred_region
      %s14 = ssub.s32 256, 256
      %15 = vsyncadd [#allocation4], %s14
      %s16 = sshll.u32 [#allocation3], 4
      %s17 = int_to_ptr.vmem [resolvable:$true] %s16
      %22 = dma.hbm_to_vmem [thread:$0]  %s0, 256, %s17, [#allocation4], 128, 128, 8
    $region5: #{tpu_custom_call.1} parent=1 // pred_fallthru
      _
    // Predicated region
    $region6: #{tpu_custom_call.1} parent=1 // pred_check
      _
    $region7: #{tpu_custom_call.1} parent=1 // pred_check_branch
      %24 = sbr.rel (0) target = $region9
    $region8: #{tpu_custom_call.1} parent=1 // pred_region
      _
    $region9: #{tpu_custom_call.1} parent=1 // pred_fallthru
      _
    // Predicated region
    $region10: #{tpu_custom_call.1} parent=1 // pred_check
      _
    $region11: #{tpu_custom_call.1} parent=1 // pred_check_branch
      %26 = sbr.rel (0) target = $region13
    $region12: #{tpu_custom_call.1} parent=1 // pred_region
      _
    $region13: #{tpu_custom_call.1} parent=1 // pred_fallthru
      _
    // Predicated region
    $region14: #{tpu_custom_call.1} parent=1 // pred_check
      _
    $region15: #{tpu_custom_call.1} parent=1 // pred_check_branch
      %28 = sbr.rel (0) target = $region17
    $region16: #{tpu_custom_call.1} parent=1 // pred_region
      %29 = dma.done [#allocation4], 256
    $region17: #{tpu_custom_call.1} parent=1 // pred_fallthru
      _
    %p30 = scmp.eq.s32.totalorder 0, 0
    // Predicated region
    $region18: #{tpu_custom_call.1} parent=1 // pred_check
      %p31 = pneg %p30
    $region19: #{tpu_custom_call.1} parent=1 // pred_check_branch
      %33 = sbr.rel (%p31) target = $region21
    $region20: #{tpu_custom_call.1} parent=1 // pred_region
      %vm34 = vcmask 254976
      %35 = vst.msk [vmem:[#allocation6] sm:$0x3] %vm34, 0.0
    $region21: #{tpu_custom_call.1} parent=1 // pred_fallthru
      _
    %v36 = vld [vmem:[#allocation3] sm:$0xff]
    %v37 = vld [vmem:[#allocation3 + $0x8] sm:$0xff]
    %v38 = vld [vmem:[%s1] sm:$0x3]
    %v41 = vunpack.c.l.s4 1966171168
    %v42 = vunpack.c.0.s8 %v41
    %v43 = vlaneseq
    %v44 = vshrl.u32 %v43, 7
    %v45 = vsub.s32 %v42, %v44
    %v46 = vrot.slane %v38, %v45
    %v47 = vcombine.high %v46, %v46
    %v49 = vunpack.c.l.s4 1966171168
    %v50 = vunpack.c.0.s8 %v49
    %v51 = vlaneseq
    %v52 = vshrl.u32 %v51, 7
    %v53 = vsub.s32 %v50, %v52
    %v54 = vrot.slane %v46, %v53
    %v56 = vunpack.c.l.s4 1966171168
    %v57 = vunpack.c.0.s8 %v56
    %v58 = vlaneseq
    %v59 = vshrl.u32 %v58, 7
    %v60 = vsub.s32 %v57, %v59
    %v61 = vrot.slane %v47, %v60
    %vm62 = vcmask 64512
    %v63 = vsel %vm62, %v54, 0
    %65 = vmatprep.subr.mxu0 0.0
    %66 = vmatpush1.msra.mxu0 %v36
    %67 = vmatprep.subr.mxu0 0.0
    %68 = vmatpush1.msra.mxu0 0.0
    %69 = vmatprep.subr.mxu0 0.0
    %70 = vmatpush1.msra.mxu0 0.0
    %71 = vmatprep.subr.mxu0 0.0
    %72 = vmatpush1.msra.mxu0 0.0
    %73 = vmatprep.subr.mxu0 0.0
    %74 = vmatpush1.msra.mxu0 0.0
    %75 = vmatprep.subr.mxu0 0.0
    %76 = vmatpush1.msra.mxu0 0.0
    %77 = vmatprep.subr.mxu0 0.0
    %78 = vmatpush1.msra.mxu0 0.0
    %79 = vmatprep.subr.mxu0 0.0
    %80 = vmatpush1.msra.mxu0 0.0
    %81 = vmatprep.subr.mxu0 0.0
    %82 = vmatpush1.msra.mxu0 0.0
    %83 = vmatprep.subr.mxu0 0.0
    %84 = vmatpush1.msra.mxu0 0.0
    %85 = vmatprep.subr.mxu0 0.0
    %86 = vmatpush1.msra.mxu0 0.0
    %87 = vmatprep.subr.mxu0 0.0
    %88 = vmatpush1.msra.mxu0 0.0
    %89 = vmatprep.subr.mxu0 0.0
    %90 = vmatpush1.msra.mxu0 0.0
    %91 = vmatprep.subr.mxu0 0.0
    %92 = vmatpush1.msra.mxu0 0.0
    %93 = vmatprep.subr.mxu0 0.0
    %94 = vmatpush1.msra.mxu0 0.0
    %95 = vmatprep.subr.mxu0 0.0
    %96 = vmatpush1.msra.mxu0 0.0
    %97 = vmatprep.subr.mxu0 0.0
    %98 = vmatpush1.msra.mxu0 0.0
    %99 = vmatprep.subr.mxu0 0.0
    %100 = vmatpush1.msra.mxu0 0.0
    %101 = vmatprep.subr.mxu0 0.0
    %102 = vmatpush1.msra.mxu0 0.0
    %103 = vmatprep.subr.mxu0 0.0
    %104 = vmatpush1.msra.mxu0 0.0
    %105 = vmatprep.subr.mxu0 0.0
    %106 = vmatpush1.msra.mxu0 0.0
    %107 = vmatprep.subr.mxu0 0.0
    %108 = vmatpush1.msra.mxu0 0.0
    %109 = vmatprep.subr.mxu0 0.0
    %110 = vmatpush1.msra.mxu0 0.0
    %111 = vmatprep.subr.mxu0 0.0
    %112 = vmatpush1.msra.mxu0 0.0
    %113 = vmatprep.subr.mxu0 0.0
    %114 = vmatpush1.msra.mxu0 0.0
    %115 = vmatprep.subr.mxu0 0.0
    %116 = vmatpush1.msra.mxu0 0.0
    %117 = vmatprep.subr.mxu0 0.0
    %118 = vmatpush1.msra.mxu0 0.0
    %119 = vmatprep.subr.mxu0 0.0
    %120 = vmatpush1.msra.mxu0 0.0
    %121 = vmatprep.subr.mxu0 0.0
    %122 = vmatpush1.msra.mxu0 0.0
    %123 = vmatprep.subr.mxu0 0.0
    %124 = vmatpush1.msra.mxu0 0.0
    %125 = vmatprep.subr.mxu0 0.0
    %126 = vmatpush1.msra.mxu0 0.0
    %127 = vmatprep.subr.mxu0 0.0
    %128 = vmatpush1.msra.mxu0 0.0
    %129 = vmatprep.mubr.f32.mxu0 0.0
    %130 = vmatmul.mubr.f32.gmra.mrb[0].mxu0 %v63
    %v131 = vpop.f32.mrb[0].mxu0
    %v132 = vadd.f32 0.0, %v131
    %v133 = vpop.f32.mrb[0].mxu0
    %134 = vdwg.mxu0
    %v135 = vsel %vm62, %v61, 0
    %137 = vmatprep.subr.mxu0 0.0
    %138 = vmatpush1.msra.mxu0 %v37
    %139 = vmatprep.subr.mxu0 0.0
    %140 = vmatpush1.msra.mxu0 0.0
    %141 = vmatprep.subr.mxu0 0.0
    %142 = vmatpush1.msra.mxu0 0.0
    %143 = vmatprep.subr.mxu0 0.0
    %144 = vmatpush1.msra.mxu0 0.0
    %145 = vmatprep.subr.mxu0 0.0
    %146 = vmatpush1.msra.mxu0 0.0
    %147 = vmatprep.subr.mxu0 0.0
    %148 = vmatpush1.msra.mxu0 0.0
    %149 = vmatprep.subr.mxu0 0.0
    %150 = vmatpush1.msra.mxu0 0.0
    %151 = vmatprep.subr.mxu0 0.0
    %152 = vmatpush1.msra.mxu0 0.0
    %153 = vmatprep.subr.mxu0 0.0
    %154 = vmatpush1.msra.mxu0 0.0
    %155 = vmatprep.subr.mxu0 0.0
    %156 = vmatpush1.msra.mxu0 0.0
    %157 = vmatprep.subr.mxu0 0.0
    %158 = vmatpush1.msra.mxu0 0.0
    %159 = vmatprep.subr.mxu0 0.0
    %160 = vmatpush1.msra.mxu0 0.0
    %161 = vmatprep.subr.mxu0 0.0
    %162 = vmatpush1.msra.mxu0 0.0
    %163 = vmatprep.subr.mxu0 0.0
    %164 = vmatpush1.msra.mxu0 0.0
    %165 = vmatprep.subr.mxu0 0.0
    %166 = vmatpush1.msra.mxu0 0.0
    %167 = vmatprep.subr.mxu0 0.0
    %168 = vmatpush1.msra.mxu0 0.0
    %169 = vmatprep.subr.mxu0 0.0
    %170 = vmatpush1.msra.mxu0 0.0
    %171 = vmatprep.subr.mxu0 0.0
    %172 = vmatpush1.msra.mxu0 0.0
    %173 = vmatprep.subr.mxu0 0.0
    %174 = vmatpush1.msra.mxu0 0.0
    %175 = vmatprep.subr.mxu0 0.0
    %176 = vmatpush1.msra.mxu0 0.0
    %177 = vmatprep.subr.mxu0 0.0
    %178 = vmatpush1.msra.mxu0 0.0
    %179 = vmatprep.subr.mxu0 0.0
    %180 = vmatpush1.msra.mxu0 0.0
    %181 = vmatprep.subr.mxu0 0.0
    %182 = vmatpush1.msra.mxu0 0.0
    %183 = vmatprep.subr.mxu0 0.0
    %184 = vmatpush1.msra.mxu0 0.0
    %185 = vmatprep.subr.mxu0 0.0
    %186 = vmatpush1.msra.mxu0 0.0
    %187 = vmatprep.subr.mxu0 0.0
    %188 = vmatpush1.msra.mxu0 0.0
    %189 = vmatprep.subr.mxu0 0.0
    %190 = vmatpush1.msra.mxu0 0.0
    %191 = vmatprep.subr.mxu0 0.0
    %192 = vmatpush1.msra.mxu0 0.0
    %193 = vmatprep.subr.mxu0 0.0
    %194 = vmatpush1.msra.mxu0 0.0
    %195 = vmatprep.subr.mxu0 0.0
    %196 = vmatpush1.msra.mxu0 0.0
    %197 = vmatprep.subr.mxu0 0.0
    %198 = vmatpush1.msra.mxu0 0.0
    %199 = vmatprep.subr.mxu0 0.0
    %200 = vmatpush1.msra.mxu0 0.0
    %201 = vmatprep.mubr.f32.mxu0 0.0
    %202 = vmatmul.mubr.f32.gmra.mrb[0].mxu0 %v135
    %v203 = vpop.f32.mrb[0].mxu0
    %v204 = vadd.f32 0.0, %v203
    %v205 = vpop.f32.mrb[0].mxu0
    %206 = vdwg.mxu0
    %v207 = vld [vmem:[#allocation6] sm:$0x3]
    %v210 = vrot.slane %v204, 7
    %vm211 = vcmask 1041409
    %v212 = vsel %vm211, %v210, %v132
    %v214 = vadd.f32 %v207, %v212
    %vm215 = vcmask 254976
    %216 = vst.msk [vmem:[#allocation6] sm:$0x3] %vm215, %v214
    // Predicated region
    $region22: #{tpu_custom_call.1} parent=1 // pred_check
      %p217 = pneg %p30
    $region23: #{tpu_custom_call.1} parent=1 // pred_check_branch
      %219 = sbr.rel (%p217) target = $region25
    $region24: #{tpu_custom_call.1} parent=1 // pred_region
      %v220 = vld [vmem:[#allocation6] sm:$0x3]
      %s221 = sld [smem:[#allocation2]]
      %v222 = vstv %s221
      %v223 = vmul.f32 %v220, %v222
      %224 = vst.msk [vmem:[#allocation6] sm:$0x3] %vm215, %v223
    $region25: #{tpu_custom_call.1} parent=1 // pred_fallthru
      _
    // Predicated region
    $region26: #{tpu_custom_call.1} parent=1 // pred_check
      _
    $region27: #{tpu_custom_call.1} parent=1 // pred_check_branch
      %226 = sbr.rel (0) target = $region29
    $region28: #{tpu_custom_call.1} parent=1 // pred_region
      %s228 = ssub.s32 32, 32
      %229 = vsyncadd [#allocation5], %s228
      %s231 = sshll.u32 [#allocation6], 4
      %s232 = int_to_ptr.vmem [resolvable:$true] %s231
      %234 = dma.vmem_to_hbm [thread:$0]  %s232, 32, %s3, [#allocation5]
    $region29: #{tpu_custom_call.1} parent=1 // pred_fallthru
      _
    // Predicated region
    $region30: #{tpu_custom_call.1} parent=1 // pred_check
      _
    $region31: #{tpu_custom_call.1} parent=1 // pred_check_branch
      %236 = sbr.rel (0) target = $region33
    $region32: #{tpu_custom_call.1} parent=1 // pred_region
      %237 = dma.done [#allocation5], 32
    $region33: #{tpu_custom_call.1} parent=1 // pred_fallthru
      _
    %238 = vsyncpa [#allocation4], 1
    %239 = vsyncpa [#allocation5], 1

</llo_original>
